<compile_context>
chip_gen: v5e
topology: v5e:2x2
jax: 0.10.0
libtpu: 0.0.40
codegen_flags: <defaults>
</compile_context>

<pallas_src>
import functools

import jax
import jax.numpy as jnp
from jax.experimental import pallas as pl
from jax.experimental.pallas import tpu as pltpu

LANES = 128
SUBLANES = 8
MAX_BLOCK_ROWS = 2048   # (2048,128) f32 = 1 MiB per input block


def _round_up(a, b):
    return (a + b - 1) // b * b


def _num_tensorcores():
    """Only v7x has 2 TensorCores per chip; elsewhere the extra grid axis is
    just a serialized loop that can duplicate a block's DMA + compute."""
    try:
        kind = jax.devices()[0].device_kind.lower()
    except Exception:
        return 1
    return 2 if ("v7" in kind or "7x" in kind) else 1


def _make_in_spec(rows_per_block, index_map, deep):
    if deep and hasattr(pl, "Buffered"):
        try:
            return pl.BlockSpec((rows_per_block, LANES), index_map,
                                pipeline_mode=pl.Buffered(3))
        except TypeError:
            pass   # pipeline_mode kwarg not supported in this JAX version
    return pl.BlockSpec((rows_per_block, LANES), index_map)


def _pu_partials_kernel(x_ref, t_ref, acc_ref, *, rows, rows_per_block,
                        blocks_per_core, nb_total):
    """Accumulate per-core partial sums for the PU risk estimator.

    acc_ref block is (1, 4, 8, 128):
      [0] sum(positive)                [1] sum(unlabeled)
      [2] sum(sigmoid(-x) * positive)  [3] sum(sigmoid(x) * unlabeled)
    """
    c = pl.program_id(0)
    j = pl.program_id(1)
    block_idx = c * blocks_per_core + j

    @pl.when(j == 0)
    def _init():
        acc_ref[...] = jnp.zeros_like(acc_ref)

    def _accumulate(mask_tail):
        x = x_ref[...].astype(jnp.float32)
        t = t_ref[...].astype(jnp.float32)

        if mask_tail:
            # Rows beyond the real extent hold garbage VMEM contents: zero both
            # x and t so the arithmetic masks below stay NaN-safe.  Padded
            # lanes inside real rows already carry t == 0 (and x == 0).
            row_ids = (block_idx * rows_per_block
                       + jax.lax.broadcasted_iota(jnp.int32, t.shape, 0))
            valid = row_ids < rows
            x = jnp.where(valid, x, 0.0)
            t = jnp.where(valid, t, 0.0)

        # One EUP push per element; overflow-safe (exp->inf => recip->0).
        e = jnp.exp(-x)
        y_unl = pl.reciprocal(1.0 + e, approx=False)   # sigmoid(x)  = loss(-x)
        y_pos = 1.0 - y_unl                            # sigmoid(-x) = loss(x)

        # Arithmetic masks: t in {+1, -1, 0(pad)}.
        pos_f = jnp.maximum(t, 0.0)   # 1[t == +1]
        unl_f = pos_f - t             # 1[t == -1]
        yp_p = y_pos * pos_f
        yu_u = y_unl * unl_f

        # Fold the (rows_per_block, 128) tile into one (8, 128) vreg with
        # sublane-wise VPU adds; accumulator footprint stays fixed-size.
        def fold(v):
            return v.reshape(rows_per_block // SUBLANES, SUBLANES,
                             LANES).sum(axis=0)

        acc_ref[0, 0] += fold(pos_f)
        acc_ref[0, 1] += fold(unl_f)
        acc_ref[0, 2] += fold(yp_p)
        acc_ref[0, 3] += fold(yu_u)

    is_real = block_idx < nb_total                          # not a duplicate step
    is_full = (block_idx + 1) * rows_per_block <= rows      # no ragged tail rows

    @pl.when(jnp.logical_and(is_real, is_full))
    def _fast():
        _accumulate(mask_tail=False)

    @pl.when(jnp.logical_and(is_real, jnp.logical_not(is_full)))
    def _tail():
        _accumulate(mask_tail=True)


def _finalize(s_pos, s_unl, s_yp_p, s_yu_u, prior, beta, gamma, nnPU):
    # sum(sigmoid(x)*positive) == sum(positive) - sum(sigmoid(-x)*positive)
    s_yu_p = s_pos - s_yp_p
    n_pos = jnp.maximum(jnp.float32(1.0), s_pos)   # max(min_count, sum(positive))
    n_unl = jnp.maximum(jnp.float32(1.0), s_unl)
    positive_risk = s_yp_p / n_pos
    positive_risk_neg = s_yu_p / n_pos
    unlabeled_risk = s_yu_u / n_unl
    negative_risk = unlabeled_risk - prior * positive_risk_neg
    out_std = prior * positive_risk + negative_risk
    if nnPU:
        # TODO(synk): torch uses a Python data-dependent branch and bumps the
        # Python-side counters (number_of_negative_loss, counter); the forward
        # values are reproduced with a select, the counters and any backward
        # (custom autograd) hookup have no kernel equivalent here.
        cond = negative_risk < -beta
        output = jnp.where(cond, prior * positive_risk - beta, out_std)
        x_grad = jnp.where(cond, -gamma * negative_risk, out_std)
    else:
        output = out_std
        x_grad = out_std
    return output, x_grad


def pu_loss(x, t, prior, beta=0.0, gamma=1.0, nnPU=True):
    """Pallas implementation of PULoss.forward. Returns (output, x_grad) scalars."""
    prior = float(prior)
    beta = float(beta)
    gamma = float(gamma)

    # Keep native dtypes: the kernel casts in-VMEM, so the wrapper never
    # re-reads/re-writes the whole arrays just to cast.
    x = jnp.asarray(x).reshape(-1)
    t = jnp.asarray(t).reshape(-1)
    assert x.shape == t.shape
    n = x.shape[0]

    if n == 0:
        z = jnp.float32(0.0)
        return _finalize(z, z, z, z, prior, beta, gamma, nnPU)

    # Minimal pad so the flat vector can be viewed as (rows, 128); padded
    # targets are 0, so they match neither mask.  No padding to a block
    # multiple: the single ragged tail block is masked in-kernel.
    rem = n % LANES
    if rem:
        pad = LANES - rem
        x = jnp.pad(x, (0, pad))
        t = jnp.pad(t, (0, pad))
    rows = x.shape[0] // LANES
    x2 = x.reshape(rows, LANES)
    t2 = t.reshape(rows, LANES)

    rows_per_block = min(MAX_BLOCK_ROWS, _round_up(rows, SUBLANES))
    nb_total = pl.cdiv(rows, rows_per_block)

    num_cores = _num_tensorcores()
    if nb_total < num_cores:
        num_cores = 1
    blocks_per_core = pl.cdiv(nb_total, num_cores)
    grid = (num_cores, blocks_per_core)

    def in_index_map(c, j):
        # Clamp so the DMA never walks past the array.  The only clamped step
        # (v7x, odd block count, core 1's last step) maps to that core's
        # previous block, so the re-fetch is elided and its compute is skipped
        # in-kernel via pl.when.
        return (jnp.minimum(c * blocks_per_core + j, nb_total - 1), 0)

    kernel = functools.partial(
        _pu_partials_kernel,
        rows=rows,
        rows_per_block=rows_per_block,
        blocks_per_core=blocks_per_core,
        nb_total=nb_total,
    )

    deep_pipeline = blocks_per_core >= 4   # worth a 3rd buffer only when streaming
    in_specs = [
        _make_in_spec(rows_per_block, in_index_map, deep_pipeline),
        _make_in_spec(rows_per_block, in_index_map, deep_pipeline),
    ]

    partials = pl.pallas_call(
        kernel,
        out_shape=jax.ShapeDtypeStruct((num_cores, 4, SUBLANES, LANES),
                                       jnp.float32),
        grid_spec=pltpu.PrefetchScalarGridSpec(
            num_scalar_prefetch=0,
            grid=grid,
            in_specs=in_specs,
            out_specs=pl.BlockSpec((1, 4, SUBLANES, LANES),
                                   lambda c, j: (c, 0, 0, 0)),
        ),
        compiler_params=pltpu.CompilerParams(
            dimension_semantics=("parallel", "arbitrary")),
    )(x2, t2)

    sums = jnp.sum(partials, axis=(0, 2, 3))   # (4,) tiny cross-core/vreg combine
    return _finalize(sums[0], sums[1], sums[2], sums[3], prior, beta, gamma, nnPU)


def pu_loss_ref(x, t, prior, beta=0.0, gamma=1.0, nnPU=True):
    """Pure-JAX reference mirroring the PyTorch module."""
    x = jnp.asarray(x).reshape(-1).astype(jnp.float32)
    t = jnp.asarray(t).reshape(-1).astype(jnp.float32)
    pos = (t == 1.0).astype(jnp.float32)
    unl = (t == -1.0).astype(jnp.float32)
    n_pos = jnp.maximum(1.0, pos.sum())
    n_unl = jnp.maximum(1.0, unl.sum())
    y_pos = jax.nn.sigmoid(-x)
    y_unl = jax.nn.sigmoid(x)
    positive_risk = jnp.sum(y_pos * pos / n_pos)
    positive_risk_neg = jnp.sum(y_unl * pos / n_pos)
    unlabeled_risk = jnp.sum(y_unl * unl / n_unl)
    negative_risk = unlabeled_risk - prior * positive_risk_neg
    out_std = prior * positive_risk + negative_risk
    if nnPU:
        cond = negative_risk < -beta
        output = jnp.where(cond, prior * positive_risk - beta, out_std)
        x_grad = jnp.where(cond, -gamma * negative_risk, out_std)
    else:
        output, x_grad = out_std, out_std
    return output, x_grad


if __name__ == "__main__":
    prior = 0.3
    beta = 0.0
    gamma = 1.0

    key = jax.random.PRNGKey(0)
    k_x, k_t, k_x2, k_t2 = jax.random.split(key, 4)

    # Test 1: model logits + PU labels in {+1 (positive), -1 (unlabeled)}.
    x = jax.random.normal(k_x, (64, 32), dtype=jnp.float32)
    t = jnp.where(jax.random.bernoulli(k_t, p=prior, shape=(64, 32)),
                  jnp.float32(1.0), jnp.float32(-1.0))
    out, x_grad = pu_loss(x, t, prior, beta=beta, gamma=gamma, nnPU=True)
    out = jax.block_until_ready(out)
    x_grad = jax.block_until_ready(x_grad)
    ref_out, ref_grad = pu_loss_ref(x, t, prior, beta=beta, gamma=gamma, nnPU=True)
    assert jnp.allclose(out, ref_out, atol=1e-5, rtol=1e-5), (out, ref_out)
    assert jnp.allclose(x_grad, ref_grad, atol=1e-5, rtol=1e-5), (x_grad, ref_grad)

    # Test 2: ragged length (not a multiple of 128) exercises minimal pad,
    # in-kernel tail path and the unbiased (nnPU=False) estimator.
    x2 = jax.random.normal(k_x2, (1000,), dtype=jnp.float32)
    t2 = jnp.where(jax.random.bernoulli(k_t2, p=prior, shape=(1000,)),
                   jnp.float32(1.0), jnp.float32(-1.0))
    out2, g2 = pu_loss(x2, t2, prior, beta=beta, gamma=gamma, nnPU=False)
    out2 = jax.block_until_ready(out2)
    g2 = jax.block_until_ready(g2)
    r_out2, r_g2 = pu_loss_ref(x2, t2, prior, beta=beta, gamma=gamma, nnPU=False)
    assert jnp.allclose(out2, r_out2, atol=1e-5, rtol=1e-5), (out2, r_out2)
    assert jnp.allclose(g2, r_g2, atol=1e-5, rtol=1e-5), (g2, r_g2)

    print("KERNEL_OK")
</pallas_src>

<mosaic_0001>
module attributes {stable_mosaic.version = 11 : i64} {
  func.func @_pu_partials_kernel(%arg0: i32, %arg1: i32, %arg2: memref<16x128xf32, #tpu.memory_space<vmem>>, %arg3: memref<16x128xf32, #tpu.memory_space<vmem>>, %arg4: memref<1x4x8x128xf32, #tpu.memory_space<vmem>>) attributes {dimension_semantics = [#tpu.dimension_semantics<parallel>, #tpu.dimension_semantics<arbitrary>], iteration_bounds = array<i64: 1, 1>, scalar_prefetch = 0 : i64, scratch_operands = 0 : i64, tpu.core_type = #tpu.core_type<tc>, window_params = [{transform_indices = @transform_0, window_bounds = array<i64: 16, 128>}, {transform_indices = @transform_1, window_bounds = array<i64: 16, 128>}, {transform_indices = @transform_2, window_bounds = array<i64: 1, 4, 8, 128>}]} {
    %c1_i32 = arith.constant 1 : i32
    %0 = arith.muli %arg0, %c1_i32 : i32
    %1 = arith.addi %0, %arg1 : i32
    %c0_i32 = arith.constant 0 : i32
    %2 = arith.cmpi eq, %arg1, %c0_i32 : i32
    %3 = arith.extui %2 : i1 to i32
    %c0_i32_0 = arith.constant 0 : i32
    %4 = arith.cmpi ne, %3, %c0_i32_0 : i32
    scf.if %4 {
      %cst = arith.constant 0.000000e+00 : f32
      %16 = vector.broadcast %cst : f32 to vector<1x4x8x128xf32>
      %c0 = arith.constant 0 : index
      %c0_6 = arith.constant 0 : index
      %c0_7 = arith.constant 0 : index
      %c0_8 = arith.constant 0 : index
      %17 = vector.load %arg4[%c0, %c0_6, %c0_7, %c0_8] : memref<1x4x8x128xf32, #tpu.memory_space<vmem>>, vector<1x4x8x128xf32>
      tpu.vector_store %arg4[%c0, %c0_6, %c0_7, %c0_8], %16 {strides = array<i32>} : memref<1x4x8x128xf32, #tpu.memory_space<vmem>>, vector<1x4x8x128xf32>,
    } else {
    }
    %c1_i32_1 = arith.constant 1 : i32
    %5 = arith.cmpi slt, %1, %c1_i32_1 : i32
    %c1_i32_2 = arith.constant 1 : i32
    %6 = arith.addi %1, %c1_i32_2 : i32
    %c16_i32 = arith.constant 16 : i32
    %7 = arith.muli %6, %c16_i32 : i32
    %c16_i32_3 = arith.constant 16 : i32
    %8 = arith.cmpi sle, %7, %c16_i32_3 : i32
    %9 = arith.andi %5, %8 : i1
    %10 = arith.extui %9 : i1 to i32
    %c0_i32_4 = arith.constant 0 : i32
    %11 = arith.cmpi ne, %10, %c0_i32_4 : i32
    scf.if %11 {
      %c0 = arith.constant 0 : index
      %c0_6 = arith.constant 0 : index
      %16 = vector.load %arg2[%c0, %c0_6] : memref<16x128xf32, #tpu.memory_space<vmem>>, vector<16x128xf32>
      %c0_7 = arith.constant 0 : index
      %c0_8 = arith.constant 0 : index
      %17 = vector.load %arg3[%c0_7, %c0_8] : memref<16x128xf32, #tpu.memory_space<vmem>>, vector<16x128xf32>
      %cst = arith.constant 0.000000e+00 : f32
      %18 = vector.broadcast %cst : f32 to vector<16x128xf32>
      %19 = arith.subf %18, %16 : vector<16x128xf32>
      %20 = math.exp %19 : vector<16x128xf32>
      %cst_9 = arith.constant 1.000000e+00 : f32
      %21 = vector.broadcast %cst_9 : f32 to vector<16x128xf32>
      %22 = arith.addf %21, %20 : vector<16x128xf32>
      %23 = tpu.reciprocal %22 : vector<16x128xf32> -> vector<16x128xf32>
      %cst_10 = arith.constant 1.000000e+00 : f32
      %24 = vector.broadcast %cst_10 : f32 to vector<16x128xf32>
      %25 = arith.subf %24, %23 : vector<16x128xf32>
      %cst_11 = arith.constant 0.000000e+00 : f32
      %26 = vector.broadcast %cst_11 : f32 to vector<16x128xf32>
      %27 = arith.maximumf %17, %26 : vector<16x128xf32>
      %28 = arith.subf %27, %17 : vector<16x128xf32>
      %29 = arith.mulf %25, %27 : vector<16x128xf32>
      %30 = arith.mulf %23, %28 : vector<16x128xf32>
      %c0_12 = arith.constant 0 : index
      %c0_13 = arith.constant 0 : index
      %c0_14 = arith.constant 0 : index
      %c0_15 = arith.constant 0 : index
      %31 = vector.load %arg4[%c0_12, %c0_13, %c0_14, %c0_15] : memref<1x4x8x128xf32, #tpu.memory_space<vmem>>, vector<1x1x8x128xf32>
      %32 = vector.shape_cast %31 : vector<1x1x8x128xf32> to vector<8x128xf32>
      %33 = vector.shape_cast %27 : vector<16x128xf32> to vector<2x8x128xf32>
      %cst_16 = arith.constant dense<0.000000e+00> : vector<8x128xf32>
      %34 = vector.multi_reduction <add>, %33, %cst_16 [0] : vector<2x8x128xf32> to vector<8x128xf32>
      %35 = arith.addf %32, %34 : vector<8x128xf32>
      %c0_17 = arith.constant 0 : index
      %c0_18 = arith.constant 0 : index
      %c0_19 = arith.constant 0 : index
      %c0_20 = arith.constant 0 : index
      %36 = vector.load %arg4[%c0_17, %c0_18, %c0_19, %c0_20] : memref<1x4x8x128xf32, #tpu.memory_space<vmem>>, vector<1x1x8x128xf32>
      %37 = vector.shape_cast %36 : vector<1x1x8x128xf32> to vector<8x128xf32>
      %38 = vector.shape_cast %35 : vector<8x128xf32> to vector<1x1x8x128xf32>
      tpu.vector_store %arg4[%c0_17, %c0_18, %c0_19, %c0_20], %38 {strides = array<i32>} : memref<1x4x8x128xf32, #tpu.memory_space<vmem>>, vector<1x1x8x128xf32>,
      %c0_21 = arith.constant 0 : index
      %c1 = arith.constant 1 : index
      %c0_22 = arith.constant 0 : index
      %c0_23 = arith.constant 0 : index
      %39 = vector.load %arg4[%c0_21, %c1, %c0_22, %c0_23] : memref<1x4x8x128xf32, #tpu.memory_space<vmem>>, vector<1x1x8x128xf32>
      %40 = vector.shape_cast %39 : vector<1x1x8x128xf32> to vector<8x128xf32>
      %41 = vector.shape_cast %28 : vector<16x128xf32> to vector<2x8x128xf32>
      %cst_24 = arith.constant dense<0.000000e+00> : vector<8x128xf32>
      %42 = vector.multi_reduction <add>, %41, %cst_24 [0] : vector<2x8x128xf32> to vector<8x128xf32>
      %43 = arith.addf %40, %42 : vector<8x128xf32>
      %c0_25 = arith.constant 0 : index
      %c1_26 = arith.constant 1 : index
      %c0_27 = arith.constant 0 : index
      %c0_28 = arith.constant 0 : index
      %44 = vector.load %arg4[%c0_25, %c1_26, %c0_27, %c0_28] : memref<1x4x8x128xf32, #tpu.memory_space<vmem>>, vector<1x1x8x128xf32>
      %45 = vector.shape_cast %44 : vector<1x1x8x128xf32> to vector<8x128xf32>
      %46 = vector.shape_cast %43 : vector<8x128xf32> to vector<1x1x8x128xf32>
      tpu.vector_store %arg4[%c0_25, %c1_26, %c0_27, %c0_28], %46 {strides = array<i32>} : memref<1x4x8x128xf32, #tpu.memory_space<vmem>>, vector<1x1x8x128xf32>,
      %c0_29 = arith.constant 0 : index
      %c2 = arith.constant 2 : index
      %c0_30 = arith.constant 0 : index
      %c0_31 = arith.constant 0 : index
      %47 = vector.load %arg4[%c0_29, %c2, %c0_30, %c0_31] : memref<1x4x8x128xf32, #tpu.memory_space<vmem>>, vector<1x1x8x128xf32>
      %48 = vector.shape_cast %47 : vector<1x1x8x128xf32> to vector<8x128xf32>
      %49 = vector.shape_cast %29 : vector<16x128xf32> to vector<2x8x128xf32>
      %cst_32 = arith.constant dense<0.000000e+00> : vector<8x128xf32>
      %50 = vector.multi_reduction <add>, %49, %cst_32 [0] : vector<2x8x128xf32> to vector<8x128xf32>
      %51 = arith.addf %48, %50 : vector<8x128xf32>
      %c0_33 = arith.constant 0 : index
      %c2_34 = arith.constant 2 : index
      %c0_35 = arith.constant 0 : index
      %c0_36 = arith.constant 0 : index
      %52 = vector.load %arg4[%c0_33, %c2_34, %c0_35, %c0_36] : memref<1x4x8x128xf32, #tpu.memory_space<vmem>>, vector<1x1x8x128xf32>
      %53 = vector.shape_cast %52 : vector<1x1x8x128xf32> to vector<8x128xf32>
      %54 = vector.shape_cast %51 : vector<8x128xf32> to vector<1x1x8x128xf32>
      tpu.vector_store %arg4[%c0_33, %c2_34, %c0_35, %c0_36], %54 {strides = array<i32>} : memref<1x4x8x128xf32, #tpu.memory_space<vmem>>, vector<1x1x8x128xf32>,
      %c0_37 = arith.constant 0 : index
      %c3 = arith.constant 3 : index
      %c0_38 = arith.constant 0 : index
      %c0_39 = arith.constant 0 : index
      %55 = vector.load %arg4[%c0_37, %c3, %c0_38, %c0_39] : memref<1x4x8x128xf32, #tpu.memory_space<vmem>>, vector<1x1x8x128xf32>
      %56 = vector.shape_cast %55 : vector<1x1x8x128xf32> to vector<8x128xf32>
      %57 = vector.shape_cast %30 : vector<16x128xf32> to vector<2x8x128xf32>
      %cst_40 = arith.constant dense<0.000000e+00> : vector<8x128xf32>
      %58 = vector.multi_reduction <add>, %57, %cst_40 [0] : vector<2x8x128xf32> to vector<8x128xf32>
      %59 = arith.addf %56, %58 : vector<8x128xf32>
      %c0_41 = arith.constant 0 : index
      %c3_42 = arith.constant 3 : index
      %c0_43 = arith.constant 0 : index
      %c0_44 = arith.constant 0 : index
      %60 = vector.load %arg4[%c0_41, %c3_42, %c0_43, %c0_44] : memref<1x4x8x128xf32, #tpu.memory_space<vmem>>, vector<1x1x8x128xf32>
      %61 = vector.shape_cast %60 : vector<1x1x8x128xf32> to vector<8x128xf32>
      %62 = vector.shape_cast %59 : vector<8x128xf32> to vector<1x1x8x128xf32>
      tpu.vector_store %arg4[%c0_41, %c3_42, %c0_43, %c0_44], %62 {strides = array<i32>} : memref<1x4x8x128xf32, #tpu.memory_space<vmem>>, vector<1x1x8x128xf32>,
    } else {
    }
    %true = arith.constant true
    %12 = arith.xori %8, %true : i1
    %13 = arith.andi %5, %12 : i1
    %14 = arith.extui %13 : i1 to i32
    %c0_i32_5 = arith.constant 0 : i32
    %15 = arith.cmpi ne, %14, %c0_i32_5 : i32
    scf.if %15 {
      %c0 = arith.constant 0 : index
      %c0_6 = arith.constant 0 : index
      %16 = vector.load %arg2[%c0, %c0_6] : memref<16x128xf32, #tpu.memory_space<vmem>>, vector<16x128xf32>
      %c0_7 = arith.constant 0 : index
      %c0_8 = arith.constant 0 : index
      %17 = vector.load %arg3[%c0_7, %c0_8] : memref<16x128xf32, #tpu.memory_space<vmem>>, vector<16x128xf32>
      %c16_i32_9 = arith.constant 16 : i32
      %18 = arith.muli %1, %c16_i32_9 : i32
      %19 = tpu.iota {dimensions = array<i32: 0>} : vector<16x128xi32>
      %20 = vector.broadcast %18 : i32 to vector<16x128xi32>
      %21 = arith.addi %20, %19 : vector<16x128xi32>
      %c16_i32_10 = arith.constant 16 : i32
      %22 = vector.broadcast %c16_i32_10 : i32 to vector<16x128xi32>
      %23 = arith.cmpi slt, %21, %22 : vector<16x128xi32>
      %cst = arith.constant 0.000000e+00 : f32
      %24 = vector.broadcast %cst : f32 to vector<16x128xf32>
      %25 = arith.select %23, %16, %24 : vector<16x128xi1>, vector<16x128xf32>
      %cst_11 = arith.constant 0.000000e+00 : f32
      %26 = vector.broadcast %cst_11 : f32 to vector<16x128xf32>
      %27 = arith.select %23, %17, %26 : vector<16x128xi1>, vector<16x128xf32>
      %cst_12 = arith.constant 0.000000e+00 : f32
      %28 = vector.broadcast %cst_12 : f32 to vector<16x128xf32>
      %29 = arith.subf %28, %25 : vector<16x128xf32>
      %30 = math.exp %29 : vector<16x128xf32>
      %cst_13 = arith.constant 1.000000e+00 : f32
      %31 = vector.broadcast %cst_13 : f32 to vector<16x128xf32>
      %32 = arith.addf %31, %30 : vector<16x128xf32>
      %33 = tpu.reciprocal %32 : vector<16x128xf32> -> vector<16x128xf32>
      %cst_14 = arith.constant 1.000000e+00 : f32
      %34 = vector.broadcast %cst_14 : f32 to vector<16x128xf32>
      %35 = arith.subf %34, %33 : vector<16x128xf32>
      %cst_15 = arith.constant 0.000000e+00 : f32
      %36 = vector.broadcast %cst_15 : f32 to vector<16x128xf32>
      %37 = arith.maximumf %27, %36 : vector<16x128xf32>
      %38 = arith.subf %37, %27 : vector<16x128xf32>
      %39 = arith.mulf %35, %37 : vector<16x128xf32>
      %40 = arith.mulf %33, %38 : vector<16x128xf32>
      %c0_16 = arith.constant 0 : index
      %c0_17 = arith.constant 0 : index
      %c0_18 = arith.constant 0 : index
      %c0_19 = arith.constant 0 : index
      %41 = vector.load %arg4[%c0_16, %c0_17, %c0_18, %c0_19] : memref<1x4x8x128xf32, #tpu.memory_space<vmem>>, vector<1x1x8x128xf32>
      %42 = vector.shape_cast %41 : vector<1x1x8x128xf32> to vector<8x128xf32>
      %43 = vector.shape_cast %37 : vector<16x128xf32> to vector<2x8x128xf32>
      %cst_20 = arith.constant dense<0.000000e+00> : vector<8x128xf32>
      %44 = vector.multi_reduction <add>, %43, %cst_20 [0] : vector<2x8x128xf32> to vector<8x128xf32>
      %45 = arith.addf %42, %44 : vector<8x128xf32>
      %c0_21 = arith.constant 0 : index
      %c0_22 = arith.constant 0 : index
      %c0_23 = arith.constant 0 : index
      %c0_24 = arith.constant 0 : index
      %46 = vector.load %arg4[%c0_21, %c0_22, %c0_23, %c0_24] : memref<1x4x8x128xf32, #tpu.memory_space<vmem>>, vector<1x1x8x128xf32>
      %47 = vector.shape_cast %46 : vector<1x1x8x128xf32> to vector<8x128xf32>
      %48 = vector.shape_cast %45 : vector<8x128xf32> to vector<1x1x8x128xf32>
      tpu.vector_store %arg4[%c0_21, %c0_22, %c0_23, %c0_24], %48 {strides = array<i32>} : memref<1x4x8x128xf32, #tpu.memory_space<vmem>>, vector<1x1x8x128xf32>,
      %c0_25 = arith.constant 0 : index
      %c1 = arith.constant 1 : index
      %c0_26 = arith.constant 0 : index
      %c0_27 = arith.constant 0 : index
      %49 = vector.load %arg4[%c0_25, %c1, %c0_26, %c0_27] : memref<1x4x8x128xf32, #tpu.memory_space<vmem>>, vector<1x1x8x128xf32>
      %50 = vector.shape_cast %49 : vector<1x1x8x128xf32> to vector<8x128xf32>
      %51 = vector.shape_cast %38 : vector<16x128xf32> to vector<2x8x128xf32>
      %cst_28 = arith.constant dense<0.000000e+00> : vector<8x128xf32>
      %52 = vector.multi_reduction <add>, %51, %cst_28 [0] : vector<2x8x128xf32> to vector<8x128xf32>
      %53 = arith.addf %50, %52 : vector<8x128xf32>
      %c0_29 = arith.constant 0 : index
      %c1_30 = arith.constant 1 : index
      %c0_31 = arith.constant 0 : index
      %c0_32 = arith.constant 0 : index
      %54 = vector.load %arg4[%c0_29, %c1_30, %c0_31, %c0_32] : memref<1x4x8x128xf32, #tpu.memory_space<vmem>>, vector<1x1x8x128xf32>
      %55 = vector.shape_cast %54 : vector<1x1x8x128xf32> to vector<8x128xf32>
      %56 = vector.shape_cast %53 : vector<8x128xf32> to vector<1x1x8x128xf32>
      tpu.vector_store %arg4[%c0_29, %c1_30, %c0_31, %c0_32], %56 {strides = array<i32>} : memref<1x4x8x128xf32, #tpu.memory_space<vmem>>, vector<1x1x8x128xf32>,
      %c0_33 = arith.constant 0 : index
      %c2 = arith.constant 2 : index
      %c0_34 = arith.constant 0 : index
      %c0_35 = arith.constant 0 : index
      %57 = vector.load %arg4[%c0_33, %c2, %c0_34, %c0_35] : memref<1x4x8x128xf32, #tpu.memory_space<vmem>>, vector<1x1x8x128xf32>
      %58 = vector.shape_cast %57 : vector<1x1x8x128xf32> to vector<8x128xf32>
      %59 = vector.shape_cast %39 : vector<16x128xf32> to vector<2x8x128xf32>
      %cst_36 = arith.constant dense<0.000000e+00> : vector<8x128xf32>
      %60 = vector.multi_reduction <add>, %59, %cst_36 [0] : vector<2x8x128xf32> to vector<8x128xf32>
      %61 = arith.addf %58, %60 : vector<8x128xf32>
      %c0_37 = arith.constant 0 : index
      %c2_38 = arith.constant 2 : index
      %c0_39 = arith.constant 0 : index
      %c0_40 = arith.constant 0 : index
      %62 = vector.load %arg4[%c0_37, %c2_38, %c0_39, %c0_40] : memref<1x4x8x128xf32, #tpu.memory_space<vmem>>, vector<1x1x8x128xf32>
      %63 = vector.shape_cast %62 : vector<1x1x8x128xf32> to vector<8x128xf32>
      %64 = vector.shape_cast %61 : vector<8x128xf32> to vector<1x1x8x128xf32>
      tpu.vector_store %arg4[%c0_37, %c2_38, %c0_39, %c0_40], %64 {strides = array<i32>} : memref<1x4x8x128xf32, #tpu.memory_space<vmem>>, vector<1x1x8x128xf32>,
      %c0_41 = arith.constant 0 : index
      %c3 = arith.constant 3 : index
      %c0_42 = arith.constant 0 : index
      %c0_43 = arith.constant 0 : index
      %65 = vector.load %arg4[%c0_41, %c3, %c0_42, %c0_43] : memref<1x4x8x128xf32, #tpu.memory_space<vmem>>, vector<1x1x8x128xf32>
      %66 = vector.shape_cast %65 : vector<1x1x8x128xf32> to vector<8x128xf32>
      %67 = vector.shape_cast %40 : vector<16x128xf32> to vector<2x8x128xf32>
      %cst_44 = arith.constant dense<0.000000e+00> : vector<8x128xf32>
      %68 = vector.multi_reduction <add>, %67, %cst_44 [0] : vector<2x8x128xf32> to vector<8x128xf32>
      %69 = arith.addf %66, %68 : vector<8x128xf32>
      %c0_45 = arith.constant 0 : index
      %c3_46 = arith.constant 3 : index
      %c0_47 = arith.constant 0 : index
      %c0_48 = arith.constant 0 : index
      %70 = vector.load %arg4[%c0_45, %c3_46, %c0_47, %c0_48] : memref<1x4x8x128xf32, #tpu.memory_space<vmem>>, vector<1x1x8x128xf32>
      %71 = vector.shape_cast %70 : vector<1x1x8x128xf32> to vector<8x128xf32>
      %72 = vector.shape_cast %69 : vector<8x128xf32> to vector<1x1x8x128xf32>
      tpu.vector_store %arg4[%c0_45, %c3_46, %c0_47, %c0_48], %72 {strides = array<i32>} : memref<1x4x8x128xf32, #tpu.memory_space<vmem>>, vector<1x1x8x128xf32>,
    } else {
    }
    return
  }
  func.func @transform_0(%arg0: i32, %arg1: i32) -> (i32, i32) {
    %c1_i32 = arith.constant 1 : i32
    %0 = arith.muli %arg0, %c1_i32 : i32
    %1 = arith.addi %0, %arg1 : i32
    %c0_i32 = arith.constant 0 : i32
    %2 = arith.minsi %1, %c0_i32 : i32
    %c0_i32_0 = arith.constant 0 : i32
    %c0_i32_1 = arith.constant 0 : i32
    return %2, %c0_i32_0 : i32, i32
  }
  func.func @transform_1(%arg0: i32, %arg1: i32) -> (i32, i32) {
    %c1_i32 = arith.constant 1 : i32
    %0 = arith.muli %arg0, %c1_i32 : i32
    %1 = arith.addi %0, %arg1 : i32
    %c0_i32 = arith.constant 0 : i32
    %2 = arith.minsi %1, %c0_i32 : i32
    %c0_i32_0 = arith.constant 0 : i32
    %c0_i32_1 = arith.constant 0 : i32
    return %2, %c0_i32_0 : i32, i32
  }
  func.func @transform_2(%arg0: i32, %arg1: i32) -> (i32, i32, i32, i32) {
    %c0_i32 = arith.constant 0 : i32
    %c0_i32_0 = arith.constant 0 : i32
    %c0_i32_1 = arith.constant 0 : i32
    %c0_i32_2 = arith.constant 0 : i32
    return %arg0, %c0_i32, %c0_i32_0, %c0_i32_1 : i32, i32, i32, i32
  }
}

</mosaic_0001>

<llo_original>
// kernel: tpu_custom_call.1
$region0: #{tpu_custom_call.1}
  #allocation0 [shape = 'u32[]', space=smem, size = 0x4, offset = 0x4, fixed_abs, tag = 'smem constant byte address 0x4 - core index']
  #allocation1 [shape = 'u32[72,128]{1,0:T(1,128)}', space=vmem, size = 0x9000, scoped, tag = 'internal scratch']
  %s0 = inlined_call_operand.hbm [shape: f32[16,128], index: 0, kind: input, shape index: {}]
  %s1 = inlined_call_operand.hbm [shape: f32[16,128], index: 1, kind: input, shape index: {}]
  %s2 = inlined_call_operand.hbm [shape: f32[1,4,8,128], index: 2, kind: output, shape index: {}]
  %s3 = sld [smem:[#allocation0]]
  $region38: #{tpu_custom_call.1} parent=0
    _
  %s5 = ssub.s32 1, %s3
  %s6 = scalar_select 0, %s5, %s3
  $region1: #{tpu_custom_call.1} parent=0
    #allocation2 [shape = 'u8[8192]{0}', space=vmem, size = 0x2000, scoped, tag = 'input window, operand 0, single buffered']
    #allocation3 [shape = 's32[1]{0}', space=sflag, size = 0x4, scoped, tag = 'scoped memory for tpu_custom_call.1']
    #allocation4 [shape = 's32[1]{0}', space=sflag, size = 0x4, scoped, tag = 'scoped memory for tpu_custom_call.1']
    #allocation5 [shape = 'u8[8192]{0}', space=vmem, size = 0x2000, scoped, tag = 'input window, operand 1, single buffered']
    #allocation6 [shape = 's32[1]{0}', space=sflag, size = 0x4, scoped, tag = 'scoped memory for tpu_custom_call.1']
    #allocation7 [shape = 'u8[16384]{0}', space=vmem, size = 0x4000, scoped, tag = 'output window, operand 0, single buffered']
    %7 = vsyncpa [#allocation3], 0
    %8 = vsyncpa [#allocation6], 0
    %9 = vsyncpa [#allocation4], 0
    // Predicated region
    $region2: #{tpu_custom_call.1} parent=1 // pred_check
      _
    $region3: #{tpu_custom_call.1} parent=1 // pred_check_branch
      %11 = sbr.rel (0) target = $region5
    $region4: #{tpu_custom_call.1} parent=1 // pred_region
      %s12 = sadd.s32 0, 0
      %p13 = scmp.lt.s32.totalorder %s12, 0
      %s14 = scalar_select %p13, %s12, 0
      %s15 = smul.u32 2, %s14
      %17 = vsyncadd [#allocation3], 0
      %s18 = smul.addr %s15, 8
      %s19 = scalar_lea.hbm %s0, %s18
      %s20 = sshll.u32 %s19, 4
      %s21 = int_to_ptr.hbm [resolvable:$true] %s20
      %s22 = sshll.u32 [#allocation2], 4
      %s23 = int_to_ptr.vmem [resolvable:$true] %s22
      %28 = dma.hbm_to_vmem [thread:$0]  %s21, 256, %s23, [#allocation3], 128, 128, 8
    $region5: #{tpu_custom_call.1} parent=1 // pred_fallthru
      _
    // Predicated region
    $region6: #{tpu_custom_call.1} parent=1 // pred_check
      _
    $region7: #{tpu_custom_call.1} parent=1 // pred_check_branch
      %30 = sbr.rel (0) target = $region9
    $region8: #{tpu_custom_call.1} parent=1 // pred_region
      %s31 = sadd.s32 0, 0
      %p32 = scmp.lt.s32.totalorder %s31, 0
      %s33 = scalar_select %p32, %s31, 0
      %s34 = smul.u32 2, %s33
      %36 = vsyncadd [#allocation6], 0
      %s37 = smul.addr %s34, 8
      %s38 = scalar_lea.hbm %s1, %s37
      %s39 = sshll.u32 %s38, 4
      %s40 = int_to_ptr.hbm [resolvable:$true] %s39
      %s41 = sshll.u32 [#allocation5], 4
      %s42 = int_to_ptr.vmem [resolvable:$true] %s41
      %47 = dma.hbm_to_vmem [thread:$0]  %s40, 256, %s42, [#allocation6], 128, 128, 8
    $region9: #{tpu_custom_call.1} parent=1 // pred_fallthru
      _
    // Predicated region
    $region10: #{tpu_custom_call.1} parent=1 // pred_check
      _
    $region11: #{tpu_custom_call.1} parent=1 // pred_check_branch
      %49 = sbr.rel (0) target = $region13
    $region12: #{tpu_custom_call.1} parent=1 // pred_region
      %51 = dma.done [#allocation3], 256
    $region13: #{tpu_custom_call.1} parent=1 // pred_fallthru
      _
    // Predicated region
    $region14: #{tpu_custom_call.1} parent=1 // pred_check
      _
    $region15: #{tpu_custom_call.1} parent=1 // pred_check_branch
      %53 = sbr.rel (0) target = $region17
    $region16: #{tpu_custom_call.1} parent=1 // pred_region
      %55 = dma.done [#allocation6], 256
    $region17: #{tpu_custom_call.1} parent=1 // pred_fallthru
      _
    %s56 = sadd.s32 0, 0
    %p57 = scmp.lt.s32.totalorder %s56, 0
    %s58 = scalar_select %p57, %s56, 0
    %s59 = smul.u32 2, %s58
    %s60 = sadd.s32 0, 0
    %p61 = scmp.lt.s32.totalorder %s60, 0
    %s62 = scalar_select %p61, %s60, 0
    %s63 = smul.u32 2, %s62
    %s64 = sadd.s32 0, 0
    %p65 = scmp.eq.s32.totalorder 0, 0
    // Predicated region
    $region18: #{tpu_custom_call.1} parent=1 // pred_check
      %p66 = pneg %p65
    $region19: #{tpu_custom_call.1} parent=1 // pred_check_branch
      %68 = sbr.rel (%p66) target = $region21
    $region20: #{tpu_custom_call.1} parent=1 // pred_region
      %69 = vst [vmem:[#allocation7] sm:$0xff] 0.0
      %70 = vst [vmem:[#allocation7 + $0x8] sm:$0xff] 0.0
      %71 = vst [vmem:[#allocation7 + $0x10] sm:$0xff] 0.0
      %72 = vst [vmem:[#allocation7 + $0x18] sm:$0xff] 0.0
    $region21: #{tpu_custom_call.1} parent=1 // pred_fallthru
      _
    %p73 = scmp.lt.s32.totalorder %s64, 1
    %s74 = sadd.s32 %s64, 1
    %s75 = smul.u32 %s74, 16
    %p76 = scmp.le.s32.totalorder %s75, 16
    %p77 = pnand %p73, %p76
    %p78 = pneg %p77
    // Predicated region
    $region22: #{tpu_custom_call.1} parent=1 // pred_check
      _
    $region23: #{tpu_custom_call.1} parent=1 // pred_check_branch
      %80 = sbr.rel (%p77) target = $region25
    $region24: #{tpu_custom_call.1} parent=1 // pred_region
      %v81 = vld [vmem:[#allocation2] sm:$0xff]
      %v82 = vld [vmem:[#allocation2 + $0x8] sm:$0xff]
      %v83 = vld [vmem:[#allocation5] sm:$0xff]
      %v84 = vld [vmem:[#allocation5 + $0x8] sm:$0xff]
      %v85 = vsub.f32 0.0, %v81
      %v86 = vsub.f32 0.0, %v82
      %v87 = vmul.f32 %v85, 1.442695
      %v88 = vpow.pop %v87
      %v89 = vmul.f32 %v86, 1.442695
      %v90 = vpow.pop %v89
      %v91 = vadd.f32 %v88, 1.0
      %v92 = vadd.f32 %v90, 1.0
      %v93 = vrcp.pop %v91
      %v94 = vmul.f32 %v91, %v93
      %v95 = vsub.f32 1.0, %v94
      %v96 = vmul.f32 %v93, %v95
      %v97 = vadd.f32 %v93, %v96
      %vm98 = vweird.f32 %v91
      %vm99 = vweird.f32 %v93
      %vm100 = vmor %vm98, %vm99
      %v101 = vsel %vm100, %v93, %v97
      %v102 = vand.u32 2147483647, %v91
      %vm103 = vcmp.eq.f32.partialorder %v102, 8.507059e+37
      %v104 = vand.u32 %v91, 2147483648
      %v105 = vor.u32 1.1754944e-38, %v104
      %v106 = vsel %vm103, %v105, %v101
      %v107 = vrcp.pop %v92
      %v108 = vmul.f32 %v92, %v107
      %v109 = vsub.f32 1.0, %v108
      %v110 = vmul.f32 %v107, %v109
      %v111 = vadd.f32 %v107, %v110
      %vm112 = vweird.f32 %v92
      %vm113 = vweird.f32 %v107
      %vm114 = vmor %vm112, %vm113
      %v115 = vsel %vm114, %v107, %v111
      %v116 = vand.u32 2147483647, %v92
      %vm117 = vcmp.eq.f32.partialorder %v116, 8.507059e+37
      %v118 = vand.u32 %v92, 2147483648
      %v119 = vor.u32 1.1754944e-38, %v118
      %v120 = vsel %vm117, %v119, %v115
      %v121 = vsub.f32 1.0, %v106
      %v122 = vsub.f32 1.0, %v120
      %v123 = vmax.f32 %v83, 0.0
      %v124 = vmax.f32 %v84, 0.0
      %v125 = vsub.f32 %v123, %v83
      %v126 = vsub.f32 %v124, %v84
      %v127 = vmul.f32 %v121, %v123
      %v128 = vmul.f32 %v122, %v124
      %v129 = vmul.f32 %v106, %v125
      %v130 = vmul.f32 %v120, %v126
      %v131 = vld [vmem:[#allocation7] sm:$0xff]
      %v132 = vadd.f32 %v123, %v124
      %v133 = vadd.f32 %v131, %v132
      %134 = vst [vmem:[#allocation7] sm:$0xff] %v133
      %s135 = scalar_lea.vmem [#allocation7], 8
      %v136 = vld [vmem:[%s135] sm:$0xff]
      %v137 = vadd.f32 %v125, %v126
      %v138 = vadd.f32 %v136, %v137
      %139 = vst [vmem:[%s135] sm:$0xff] %v138
      %s140 = scalar_lea.vmem [#allocation7], 16
      %v141 = vld [vmem:[%s140] sm:$0xff]
      %v142 = vadd.f32 %v127, %v128
      %v143 = vadd.f32 %v141, %v142
      %144 = vst [vmem:[%s140] sm:$0xff] %v143
      %s145 = scalar_lea.vmem [#allocation7], 24
      %v146 = vld [vmem:[%s145] sm:$0xff]
      %v147 = vadd.f32 %v129, %v130
      %v148 = vadd.f32 %v146, %v147
      %149 = vst [vmem:[%s145] sm:$0xff] %v148
    $region25: #{tpu_custom_call.1} parent=1 // pred_fallthru
      _
    %p150 = scmp.gt.s32.totalorder %s75, 16
    %p151 = pnand %p73, %p150
    %p152 = pneg %p151
    // Predicated region
    $region26: #{tpu_custom_call.1} parent=1 // pred_check
      _
    $region27: #{tpu_custom_call.1} parent=1 // pred_check_branch
      %154 = sbr.rel (%p151) target = $region29
    $region28: #{tpu_custom_call.1} parent=1 // pred_region
      %v155 = vld [vmem:[#allocation2] sm:$0xff]
      %v156 = vld [vmem:[#allocation2 + $0x8] sm:$0xff]
      %v157 = vld [vmem:[#allocation5] sm:$0xff]
      %v158 = vld [vmem:[#allocation5 + $0x8] sm:$0xff]
      %s159 = smul.u32 %s64, 16
      %v160 = vlaneseq
      %v161 = vshrl.u32 %v160, 7
      %v162 = vadd.s32 %v161, 8
      %v163 = vstv %s159
      %v164 = vadd.s32 %v163, %v161
      %v165 = vadd.s32 %v163, %v162
      %vm166 = vcmp.lt.s32.totalorder %v164, 16
      %vm167 = vcmp.lt.s32.totalorder %v165, 16
      %v168 = vsel %vm166, %v155, 0.0
      %v169 = vsel %vm167, %v156, 0.0
      %v170 = vsel %vm166, %v157, 0.0
      %v171 = vsel %vm167, %v158, 0.0
      %v172 = vsub.f32 0.0, %v168
      %v173 = vsub.f32 0.0, %v169
      %v174 = vmul.f32 %v172, 1.442695
      %v175 = vpow.pop %v174
      %v176 = vmul.f32 %v173, 1.442695
      %v177 = vpow.pop %v176
      %v178 = vadd.f32 %v175, 1.0
      %v179 = vadd.f32 %v177, 1.0
      %v180 = vrcp.pop %v178
      %v181 = vmul.f32 %v178, %v180
      %v182 = vsub.f32 1.0, %v181
      %v183 = vmul.f32 %v180, %v182
      %v184 = vadd.f32 %v180, %v183
      %vm185 = vweird.f32 %v178
      %vm186 = vweird.f32 %v180
      %vm187 = vmor %vm185, %vm186
      %v188 = vsel %vm187, %v180, %v184
      %v189 = vand.u32 2147483647, %v178
      %vm190 = vcmp.eq.f32.partialorder %v189, 8.507059e+37
      %v191 = vand.u32 %v178, 2147483648
      %v192 = vor.u32 1.1754944e-38, %v191
      %v193 = vsel %vm190, %v192, %v188
      %v194 = vrcp.pop %v179
      %v195 = vmul.f32 %v179, %v194
      %v196 = vsub.f32 1.0, %v195
      %v197 = vmul.f32 %v194, %v196
      %v198 = vadd.f32 %v194, %v197
      %vm199 = vweird.f32 %v179
      %vm200 = vweird.f32 %v194
      %vm201 = vmor %vm199, %vm200
      %v202 = vsel %vm201, %v194, %v198
      %v203 = vand.u32 2147483647, %v179
      %vm204 = vcmp.eq.f32.partialorder %v203, 8.507059e+37
      %v205 = vand.u32 %v179, 2147483648
      %v206 = vor.u32 1.1754944e-38, %v205
      %v207 = vsel %vm204, %v206, %v202
      %v208 = vsub.f32 1.0, %v193
      %v209 = vsub.f32 1.0, %v207
      %v210 = vmax.f32 %v170, 0.0
      %v211 = vmax.f32 %v171, 0.0
      %v212 = vsub.f32 %v210, %v170
      %v213 = vsub.f32 %v211, %v171
      %v214 = vmul.f32 %v208, %v210
      %v215 = vmul.f32 %v209, %v211
      %v216 = vmul.f32 %v193, %v212
      %v217 = vmul.f32 %v207, %v213
      %v218 = vld [vmem:[#allocation7] sm:$0xff]
      %v219 = vadd.f32 %v210, %v211
      %v220 = vadd.f32 %v218, %v219
      %221 = vst [vmem:[#allocation7] sm:$0xff] %v220
      %s222 = scalar_lea.vmem [#allocation7], 8
      %v223 = vld [vmem:[%s222] sm:$0xff]
      %v224 = vadd.f32 %v212, %v213
      %v225 = vadd.f32 %v223, %v224
      %226 = vst [vmem:[%s222] sm:$0xff] %v225
      %s227 = scalar_lea.vmem [#allocation7], 16
      %v228 = vld [vmem:[%s227] sm:$0xff]
      %v229 = vadd.f32 %v214, %v215
      %v230 = vadd.f32 %v228, %v229
      %231 = vst [vmem:[%s227] sm:$0xff] %v230
      %s232 = scalar_lea.vmem [#allocation7], 24
      %v233 = vld [vmem:[%s232] sm:$0xff]
      %v234 = vadd.f32 %v216, %v217
      %v235 = vadd.f32 %v233, %v234
      %236 = vst [vmem:[%s232] sm:$0xff] %v235
    $region29: #{tpu_custom_call.1} parent=1 // pred_fallthru
      _
    // Predicated region
    $region30: #{tpu_custom_call.1} parent=1 // pred_check
      _
    $region31: #{tpu_custom_call.1} parent=1 // pred_check_branch
      %238 = sbr.rel (0) target = $region33
    $region32: #{tpu_custom_call.1} parent=1 // pred_region
      %240 = vsyncadd [#allocation4], 0
      %s241 = sshll.u32 [#allocation7], 4
      %s242 = int_to_ptr.vmem [resolvable:$true] %s241
      %s243 = sshll.u32 %s2, 4
      %s244 = int_to_ptr.hbm [resolvable:$true] %s243
      %249 = dma.vmem_to_hbm [thread:$0]  %s242, 512, %s244, [#allocation4], 128, 128, 8
    $region33: #{tpu_custom_call.1} parent=1 // pred_fallthru
      _
    // Predicated region
    $region34: #{tpu_custom_call.1} parent=1 // pred_check
      _
    $region35: #{tpu_custom_call.1} parent=1 // pred_check_branch
      %251 = sbr.rel (0) target = $region37
    $region36: #{tpu_custom_call.1} parent=1 // pred_region
      %253 = dma.done [#allocation4], 512
    $region37: #{tpu_custom_call.1} parent=1 // pred_fallthru
      _
    %254 = vsyncpa [#allocation3], 1
    %255 = vsyncpa [#allocation6], 1
    %256 = vsyncpa [#allocation4], 1

</llo_original>
